<compile_context>
chip_gen: v5e
topology: v5e:2x2
jax: 0.10.0
libtpu: 0.0.40
codegen_flags: <defaults>
</compile_context>

<pallas_src>
import functools

import jax
import jax.numpy as jnp
from jax import lax
from jax.experimental import pallas as pl
from jax.experimental.pallas import tpu as pltpu

_LANES = 128
_SUBLANES = 8


def _rmse_sse_kernel(o_ref, l_ref, out_ref, *, block_rows, acc_rows,
                     num_blocks, last_valid_rows):
    """Accumulates (acc_rows, 128) partial sums of (o - l)**2 into out_ref."""
    i = pl.program_id(0)

    @pl.when(i == 0)
    def _():
        out_ref[...] = jnp.zeros_like(out_ref)

    def tile_contrib(valid_rows=None):
        d = o_ref[...].astype(jnp.float32) - l_ref[...].astype(jnp.float32)
        sq = d * d
        if valid_rows is not None:
            # Static count: only the ragged last block pays for the mask, and
            # jnp.where(False, nan/inf, 0) drops any OOB garbage exactly.
            row_ids = lax.broadcasted_iota(jnp.int32, (block_rows, 1), 0)
            sq = jnp.where(row_ids < valid_rows, sq, 0.0)
        # (block_rows,128) -> (block_rows//acc_rows, acc_rows, 128); the axis-0
        # sum is pure vreg-wise VALU work (no per-step cross-lane XLU reduce).
        return sq.reshape(block_rows // acc_rows, acc_rows, _LANES).sum(axis=0)

    if last_valid_rows < block_rows:
        is_last = i == num_blocks - 1

        @pl.when(i != num_blocks - 1)
        def _():
            out_ref[...] += tile_contrib()

        @pl.when(is_last)
        def _():
            out_ref[...] += tile_contrib(last_valid_rows)
    else:
        out_ref[...] += tile_contrib()


def loss_rmse(outputs, label, *, block_rows=None, block_bytes=4 << 20):
    """RMSE over all elements; matches torch.sqrt(torch.mean((o - l) ** 2))."""
    assert outputs.shape == label.shape, "outputs/label shape mismatch"
    total = int(outputs.size)
    if total == 0:
        return jnp.float32(0.0)

    o = outputs.reshape(-1)
    l = label.reshape(-1)

    it_o = jnp.dtype(outputs.dtype).itemsize
    it_l = jnp.dtype(label.dtype).itemsize
    # Packed sublane multiple: 8 for 32-bit, 16 for 16-bit, 32 for 8-bit.
    sub = _SUBLANES * max(1, 4 // min(it_o, it_l))
    chunk = sub * _LANES

    main = (total // chunk) * chunk          # kernel-reduced prefix
    tail = total - main                      # < chunk elems, reduced by jnp

    sse_main = jnp.float32(0.0)
    if main:
        rows = main // _LANES                # multiple of `sub`
        o2 = o[:main].reshape(rows, _LANES)
        l2 = l[:main].reshape(rows, _LANES)

        if block_rows is None:
            # Constant per-step DMA bytes regardless of dtype width.
            block_rows = block_bytes // (_LANES * max(it_o, it_l))
        # Keep 2 inputs x 2 pipeline buffers under ~40 MiB for any dtype.
        budget_rows = (40 << 20) // (2 * _LANES * (it_o + it_l))
        block_rows = min(int(block_rows), budget_rows, rows)
        block_rows = max(sub, (block_rows // sub) * sub)

        num_blocks = -(-rows // block_rows)
        last_valid_rows = rows - (num_blocks - 1) * block_rows

        # Wider-than-one-vreg accumulator shortens the per-tile reduction
        # dependency chain (cheap insurance on v7x / bf16 streams).
        acc_rows = next(r for r in (64, 32, 16, 8) if block_rows % r == 0)

        kernel = functools.partial(
            _rmse_sse_kernel,
            block_rows=block_rows,
            acc_rows=acc_rows,
            num_blocks=num_blocks,
            last_valid_rows=last_valid_rows,
        )

        partial_sums = pl.pallas_call(
            kernel,
            out_shape=jax.ShapeDtypeStruct((acc_rows, _LANES), jnp.float32),
            grid_spec=pltpu.PrefetchScalarGridSpec(
                num_scalar_prefetch=0,
                grid=(num_blocks,),
                in_specs=[
                    pl.BlockSpec((block_rows, _LANES), lambda i: (i, 0)),
                    pl.BlockSpec((block_rows, _LANES), lambda i: (i, 0)),
                ],
                out_specs=pl.BlockSpec((acc_rows, _LANES), lambda i: (0, 0)),
            ),
            compiler_params=pltpu.CompilerParams(
                dimension_semantics=("arbitrary",),
                vmem_limit_bytes=48 * 1024 * 1024,
            ),
        )(o2, l2)
        sse_main = jnp.sum(partial_sums)

    if tail:
        ot = o[main:].astype(jnp.float32)
        lt = l[main:].astype(jnp.float32)
        sse_tail = jnp.sum((ot - lt) ** 2)
    else:
        sse_tail = jnp.float32(0.0)

    rmse = jnp.sqrt((sse_main + sse_tail) / jnp.float32(total))
    res_dtype = jnp.promote_types(outputs.dtype, label.dtype)
    if jnp.issubdtype(res_dtype, jnp.floating):
        rmse = rmse.astype(res_dtype)
    return rmse


if __name__ == "__main__":
    key = jax.random.PRNGKey(0)
    k1, k2, k3, k4, k5, k6 = jax.random.split(key, 6)

    def ref_rmse(a, b):
        d = a.astype(jnp.float32) - b.astype(jnp.float32)
        return jnp.sqrt(jnp.mean(d * d))

    # Small NCHW-shaped example inputs (Loss_RMSE takes any matching shapes).
    shape = (2, 4, 16, 16)
    outputs = jax.random.normal(k1, shape, dtype=jnp.float32)
    label = jax.random.normal(k2, shape, dtype=jnp.float32)
    result = jax.block_until_ready(loss_rmse(outputs, label))
    ref = ref_rmse(outputs, label)
    assert jnp.allclose(result, ref, rtol=1e-5, atol=1e-6), (result, ref)

    # Ragged size: exercises the in-wrapper jnp tail path (no concatenate pad).
    shape2 = (3, 5, 7, 11)
    o2 = jax.random.normal(k3, shape2, dtype=jnp.float32)
    l2 = jax.random.normal(k4, shape2, dtype=jnp.float32)
    r2 = jax.block_until_ready(loss_rmse(o2, l2))
    assert jnp.allclose(r2, ref_rmse(o2, l2), rtol=1e-5, atol=1e-6), r2

    # Multi-block grid with a ragged LAST block (24 rows, block_rows=16):
    # exercises the pl.when-gated masked tile.
    shape3 = (2, 3, 32, 16)
    o3 = jax.random.normal(k5, shape3, dtype=jnp.float32)
    l3 = jax.random.normal(k6, shape3, dtype=jnp.float32)
    r3 = jax.block_until_ready(loss_rmse(o3, l3, block_rows=16))
    assert jnp.allclose(r3, ref_rmse(o3, l3), rtol=1e-5, atol=1e-6), r3

    # Same data, 3 full blocks of 8 rows: mask-free resident-accumulator path.
    r3b = jax.block_until_ready(loss_rmse(o3, l3, block_rows=8))
    assert jnp.allclose(r3b, ref_rmse(o3, l3), rtol=1e-5, atol=1e-6), r3b

    # bf16 inputs: native-dtype streaming with (16, 128) packed tiles.
    ob = outputs.astype(jnp.bfloat16)
    lb = label.astype(jnp.bfloat16)
    rb = jax.block_until_ready(loss_rmse(ob, lb))
    assert jnp.allclose(jnp.float32(rb), ref_rmse(ob, lb), rtol=2e-2), rb

    print("KERNEL_OK")
</pallas_src>

<mosaic_0001>
module attributes {stable_mosaic.version = 11 : i64} {
  func.func @_rmse_sse_kernel(%arg0: i32, %arg1: memref<16x128xf32, #tpu.memory_space<vmem>>, %arg2: memref<16x128xf32, #tpu.memory_space<vmem>>, %arg3: memref<16x128xf32, #tpu.memory_space<vmem>>) attributes {dimension_semantics = [#tpu.dimension_semantics<arbitrary>], iteration_bounds = array<i64: 1>, scalar_prefetch = 0 : i64, scratch_operands = 0 : i64, tpu.core_type = #tpu.core_type<tc>, window_params = [{transform_indices = @transform_0, window_bounds = array<i64: 16, 128>}, {transform_indices = @transform_1, window_bounds = array<i64: 16, 128>}, {pipeline_mode = #tpu.pipeline_mode<synchronous>, transform_indices = @transform_2, window_bounds = array<i64: 16, 128>}]} {
    %c0_i32 = arith.constant 0 : i32
    %0 = arith.cmpi eq, %arg0, %c0_i32 : i32
    %1 = arith.extui %0 : i1 to i32
    %c0_i32_0 = arith.constant 0 : i32
    %2 = arith.cmpi ne, %1, %c0_i32_0 : i32
    scf.if %2 {
      %cst_8 = arith.constant 0.000000e+00 : f32
      %12 = vector.broadcast %cst_8 : f32 to vector<16x128xf32>
      %c0_9 = arith.constant 0 : index
      %c0_10 = arith.constant 0 : index
      %13 = vector.load %arg3[%c0_9, %c0_10] : memref<16x128xf32, #tpu.memory_space<vmem>>, vector<16x128xf32>
      tpu.vector_store %arg3[%c0_9, %c0_10], %12 {strides = array<i32>} : memref<16x128xf32, #tpu.memory_space<vmem>>, vector<16x128xf32>,
    } else {
    }
    %c0 = arith.constant 0 : index
    %c0_1 = arith.constant 0 : index
    %3 = vector.load %arg3[%c0, %c0_1] : memref<16x128xf32, #tpu.memory_space<vmem>>, vector<16x128xf32>
    %c0_2 = arith.constant 0 : index
    %c0_3 = arith.constant 0 : index
    %4 = vector.load %arg1[%c0_2, %c0_3] : memref<16x128xf32, #tpu.memory_space<vmem>>, vector<16x128xf32>
    %c0_4 = arith.constant 0 : index
    %c0_5 = arith.constant 0 : index
    %5 = vector.load %arg2[%c0_4, %c0_5] : memref<16x128xf32, #tpu.memory_space<vmem>>, vector<16x128xf32>
    %6 = arith.subf %4, %5 : vector<16x128xf32>
    %7 = arith.mulf %6, %6 : vector<16x128xf32>
    %8 = vector.shape_cast %7 : vector<16x128xf32> to vector<1x16x128xf32>
    %cst = arith.constant dense<0.000000e+00> : vector<16x128xf32>
    %9 = vector.multi_reduction <add>, %8, %cst [0] : vector<1x16x128xf32> to vector<16x128xf32>
    %10 = arith.addf %3, %9 : vector<16x128xf32>
    %c0_6 = arith.constant 0 : index
    %c0_7 = arith.constant 0 : index
    %11 = vector.load %arg3[%c0_6, %c0_7] : memref<16x128xf32, #tpu.memory_space<vmem>>, vector<16x128xf32>
    tpu.vector_store %arg3[%c0_6, %c0_7], %10 {strides = array<i32>} : memref<16x128xf32, #tpu.memory_space<vmem>>, vector<16x128xf32>,
    return
  }
  func.func @transform_0(%arg0: i32) -> (i32, i32) {
    %c0_i32 = arith.constant 0 : i32
    %c0_i32_0 = arith.constant 0 : i32
    return %arg0, %c0_i32 : i32, i32
  }
  func.func @transform_1(%arg0: i32) -> (i32, i32) {
    %c0_i32 = arith.constant 0 : i32
    %c0_i32_0 = arith.constant 0 : i32
    return %arg0, %c0_i32 : i32, i32
  }
  func.func @transform_2(%arg0: i32) -> (i32, i32) {
    %c0_i32 = arith.constant 0 : i32
    %c0_i32_0 = arith.constant 0 : i32
    %c0_i32_1 = arith.constant 0 : i32
    return %c0_i32, %c0_i32_0 : i32, i32
  }
}

</mosaic_0001>

<llo_original>
// kernel: tpu_custom_call.1
$region0: #{tpu_custom_call.1}
  #allocation0 [shape = 'u32[]', space=smem, size = 0x4, offset = 0x4, fixed_abs, tag = 'smem constant byte address 0x4 - core index']
  #allocation1 [shape = 'u32[72,128]{1,0:T(1,128)}', space=vmem, size = 0x9000, scoped, tag = 'internal scratch']
  %s0 = inlined_call_operand.hbm [shape: f32[16,128], index: 0, kind: input, shape index: {}]
  %s1 = inlined_call_operand.hbm [shape: f32[16,128], index: 1, kind: input, shape index: {}]
  %s2 = inlined_call_operand.hbm [shape: f32[16,128], index: 2, kind: output, shape index: {}]
  %s3 = sld [smem:[#allocation0]]
  $region30: #{tpu_custom_call.1} parent=0
    _
  %s5 = ssub.s32 1, %s3
  %s6 = scalar_select 0, %s5, %s3
  $region1: #{tpu_custom_call.1} parent=0
    #allocation2 [shape = 'u8[8192]{0}', space=vmem, size = 0x2000, scoped, tag = 'input window, operand 0, single buffered']
    #allocation3 [shape = 's32[1]{0}', space=sflag, size = 0x4, scoped, tag = 'scoped memory for tpu_custom_call.1']
    #allocation4 [shape = 's32[1]{0}', space=sflag, size = 0x4, scoped, tag = 'scoped memory for tpu_custom_call.1']
    #allocation5 [shape = 'u8[8192]{0}', space=vmem, size = 0x2000, scoped, tag = 'input window, operand 1, single buffered']
    #allocation6 [shape = 's32[1]{0}', space=sflag, size = 0x4, scoped, tag = 'scoped memory for tpu_custom_call.1']
    #allocation7 [shape = 'u8[8192]{0}', space=vmem, size = 0x2000, scoped, tag = 'output window, operand 0, single buffered']
    %7 = vsyncpa [#allocation3], 0
    %8 = vsyncpa [#allocation6], 0
    %9 = vsyncpa [#allocation4], 0
    // Predicated region
    $region2: #{tpu_custom_call.1} parent=1 // pred_check
      _
    $region3: #{tpu_custom_call.1} parent=1 // pred_check_branch
      %11 = sbr.rel (0) target = $region5
    $region4: #{tpu_custom_call.1} parent=1 // pred_region
      %13 = vsyncadd [#allocation3], 0
      %s14 = sshll.u32 %s0, 4
      %s15 = int_to_ptr.hbm [resolvable:$true] %s14
      %s16 = sshll.u32 [#allocation2], 4
      %s17 = int_to_ptr.vmem [resolvable:$true] %s16
      %22 = dma.hbm_to_vmem [thread:$0]  %s15, 256, %s17, [#allocation3], 128, 128, 8
    $region5: #{tpu_custom_call.1} parent=1 // pred_fallthru
      _
    // Predicated region
    $region6: #{tpu_custom_call.1} parent=1 // pred_check
      _
    $region7: #{tpu_custom_call.1} parent=1 // pred_check_branch
      %24 = sbr.rel (0) target = $region9
    $region8: #{tpu_custom_call.1} parent=1 // pred_region
      %26 = vsyncadd [#allocation6], 0
      %s27 = sshll.u32 %s1, 4
      %s28 = int_to_ptr.hbm [resolvable:$true] %s27
      %s29 = sshll.u32 [#allocation5], 4
      %s30 = int_to_ptr.vmem [resolvable:$true] %s29
      %35 = dma.hbm_to_vmem [thread:$0]  %s28, 256, %s30, [#allocation6], 128, 128, 8
    $region9: #{tpu_custom_call.1} parent=1 // pred_fallthru
      _
    // Predicated region
    $region10: #{tpu_custom_call.1} parent=1 // pred_check
      _
    $region11: #{tpu_custom_call.1} parent=1 // pred_check_branch
      %37 = sbr.rel (0) target = $region13
    $region12: #{tpu_custom_call.1} parent=1 // pred_region
      %39 = dma.done [#allocation3], 256
    $region13: #{tpu_custom_call.1} parent=1 // pred_fallthru
      _
    // Predicated region
    $region14: #{tpu_custom_call.1} parent=1 // pred_check
      _
    $region15: #{tpu_custom_call.1} parent=1 // pred_check_branch
      %41 = sbr.rel (0) target = $region17
    $region16: #{tpu_custom_call.1} parent=1 // pred_region
      %43 = dma.done [#allocation6], 256
    $region17: #{tpu_custom_call.1} parent=1 // pred_fallthru
      _
    %p44 = scmp.eq.s32.totalorder 0, 0
    // Predicated region
    $region18: #{tpu_custom_call.1} parent=1 // pred_check
      %p45 = pneg %p44
    $region19: #{tpu_custom_call.1} parent=1 // pred_check_branch
      %47 = sbr.rel (%p45) target = $region21
    $region20: #{tpu_custom_call.1} parent=1 // pred_region
      %48 = vst [vmem:[#allocation7] sm:$0xff] 0.0
      %49 = vst [vmem:[#allocation7 + $0x8] sm:$0xff] 0.0
    $region21: #{tpu_custom_call.1} parent=1 // pred_fallthru
      _
    %v50 = vld [vmem:[#allocation7] sm:$0xff]
    %v51 = vld [vmem:[#allocation7 + $0x8] sm:$0xff]
    %v52 = vld [vmem:[#allocation2] sm:$0xff]
    %v53 = vld [vmem:[#allocation2 + $0x8] sm:$0xff]
    %v54 = vld [vmem:[#allocation5] sm:$0xff]
    %v55 = vld [vmem:[#allocation5 + $0x8] sm:$0xff]
    %v56 = vsub.f32 %v52, %v54
    %v57 = vsub.f32 %v53, %v55
    %v58 = vmul.f32 %v56, %v56
    %v59 = vmul.f32 %v57, %v57
    %v60 = vadd.f32 %v58, 0.0
    %v61 = vadd.f32 %v59, 0.0
    %v62 = vadd.f32 %v50, %v60
    %v63 = vadd.f32 %v51, %v61
    %64 = vst [vmem:[#allocation7] sm:$0xff] %v62
    %65 = vst [vmem:[#allocation7 + $0x8] sm:$0xff] %v63
    // Predicated region
    $region22: #{tpu_custom_call.1} parent=1 // pred_check
      _
    $region23: #{tpu_custom_call.1} parent=1 // pred_check_branch
      %67 = sbr.rel (0) target = $region25
    $region24: #{tpu_custom_call.1} parent=1 // pred_region
      %69 = vsyncadd [#allocation4], 0
      %s70 = sshll.u32 [#allocation7], 4
      %s71 = int_to_ptr.vmem [resolvable:$true] %s70
      %s72 = sshll.u32 %s2, 4
      %s73 = int_to_ptr.hbm [resolvable:$true] %s72
      %78 = dma.vmem_to_hbm [thread:$0]  %s71, 256, %s73, [#allocation4], 128, 128, 8
    $region25: #{tpu_custom_call.1} parent=1 // pred_fallthru
      _
    // Predicated region
    $region26: #{tpu_custom_call.1} parent=1 // pred_check
      _
    $region27: #{tpu_custom_call.1} parent=1 // pred_check_branch
      %80 = sbr.rel (0) target = $region29
    $region28: #{tpu_custom_call.1} parent=1 // pred_region
      %82 = dma.done [#allocation4], 256
    $region29: #{tpu_custom_call.1} parent=1 // pred_fallthru
      _
    %83 = vsyncpa [#allocation3], 1
    %84 = vsyncpa [#allocation6], 1
    %85 = vsyncpa [#allocation4], 1

</llo_original>
